<compile_context>
chip_gen: v7x
topology: tpu7x:2x2x1
jax: 0.10.0
libtpu: 0.0.40
codegen_flags: <defaults>
</compile_context>

<pallas_src>
import functools

import jax
import jax.numpy as jnp
from jax.experimental import pallas as pl
from jax.experimental.pallas import tpu as pltpu


def _wbce_kernel(x_ref, t_ref, a_ref, p_ref, s_ref, *, tile_r, rows_valid,
                 n_b_per, n_b_total, acc_rows, needs_mask):
    pi = pl.program_id(0)   # batch-half (megacore parallel) index
    bi = pl.program_id(2)   # batch-tile (reduction) index within this half

    @pl.when(bi == 0)
    def _init():
        a_ref[...] = jnp.zeros_like(a_ref)
        p_ref[...] = jnp.zeros_like(p_ref)
        s_ref[...] = jnp.zeros_like(s_ref)

    def _accumulate(mask_rows):
        x = x_ref[...].astype(jnp.float32)            # (tile_r, tile_l) logits
        t = jnp.abs(t_ref[...].astype(jnp.float32))   # (tile_r, tile_l) |targets|
        if mask_rows:
            # Only the single partial last tile runs this path (pl.when-gated below).
            # x = -128, t = 0 makes every accumulated term exactly 0; the where must
            # stay BEFORE the softplus so no garbage reaches the transcendentals.
            rows = jax.lax.broadcasted_iota(jnp.int32, x.shape, 0)
            row0 = (pi * n_b_per + bi) * tile_r
            valid = (row0 + rows) < rows_valid
            x = jnp.where(valid, x, -128.0)
            t = jnp.where(valid, t, 0.0)

        # Numerically stable softplus(-x).
        sp_neg_x = jnp.maximum(-x, 0.0) + jnp.log1p(jnp.exp(-jnp.abs(x)))
        a_term = (1.0 - t) * x + sp_neg_x
        p_term = t * sp_neg_x

        tl = x.shape[-1]
        if acc_rows == 8:
            # Reduce only down to 8 sublanes (pure VALU vreg adds, no XLU).
            shp = (tile_r // 8, 8, tl)
            a_ref[...] += jnp.sum(a_term.reshape(shp), axis=0)
            p_ref[...] += jnp.sum(p_term.reshape(shp), axis=0)
            s_ref[...] += jnp.sum(t.reshape(shp), axis=0)
        else:
            # tile_r not a multiple of 8 (tiny batches only): single sublane reduce.
            a_ref[...] += jnp.sum(a_term, axis=0, keepdims=True)
            p_ref[...] += jnp.sum(p_term, axis=0, keepdims=True)
            s_ref[...] += jnp.sum(t, axis=0, keepdims=True)

    if needs_mask:
        is_partial = (pi * n_b_per + bi) == (n_b_total - 1)

        @pl.when(is_partial)
        def _masked():
            _accumulate(True)

        @pl.when(jnp.logical_not(is_partial))
        def _unmasked():
            _accumulate(False)
    else:
        _accumulate(False)


def _vmem_capacity_bytes():
    try:
        info = pltpu.get_tpu_info()
        for name in ("vmem_capacity_bytes", "vmem_bytes"):
            cap = getattr(info, name, None)
            if cap:
                return int(cap)
    except Exception:
        pass
    return 128 * 1024 * 1024


def _largest_divisor_le(n, limit):
    limit = max(1, min(n, limit))
    for d in range(limit, 0, -1):
        if n % d == 0:
            return d
    return 1


def _largest_mult8_divisor_le(n, limit):
    d = (min(n, limit) // 8) * 8
    while d >= 8:
        if n % d == 0:
            return d
        d -= 8
    return 0


def weighted_bce_loss(output, target, class_weights, *, per_buffer_bytes=None):
    """output, target: (B, C) arrays (any float dtype); class_weights: (C,) floats.

    per_buffer_bytes: optional override of the per-input-buffer tile budget
    (testing / tuning knob); default is picked per TPU generation.
    """
    B, C = output.shape
    itemsize = max(output.dtype.itemsize, target.dtype.itemsize)

    # --- per-generation VMEM budget -----------------------------------------
    vmem_cap = _vmem_capacity_bytes()
    big_vmem = vmem_cap >= 100 * 1024 * 1024               # v5e / v6e (128 MiB)
    per_buf = per_buffer_bytes if per_buffer_bytes is not None else (
        (4 if big_vmem else 2) * 1024 * 1024)              # bytes per input buffer
    gen_cap = int(vmem_cap * 0.75)                         # ~96 MiB / ~48 MiB

    # --- lane packing for small C: view (B, C) as (B/g, g*C), ~1024 lanes ---
    g = 1 if C >= 1024 else _largest_divisor_le(B, max(1, 1024 // C))
    Bp, L = B // g, g * C
    xp = output.reshape(Bp, L)   # native dtype, row-major reshape -> no HBM copy
    tp = target.reshape(Bp, L)

    # --- lane tiling: full packed row unless it is gigantic ------------------
    if L <= 128 or 8 * L * itemsize <= per_buf:
        tile_l = L
    else:
        tile_l = 0
        cand = (per_buf // (8 * itemsize) // 128) * 128
        while cand >= 128:
            if L % cand == 0:
                tile_l = cand
                break
            cand -= 128
        if tile_l == 0:
            tile_l = L   # no clean multiple-of-128 split; take the big block
    n_l = L // tile_l

    # --- batch tiling: fill the per-buffer budget, prefer exact divisors -----
    target_rows = max(8, min(8192, per_buf // max(1, tile_l * itemsize)))
    target_rows = (target_rows // 8) * 8
    if Bp <= target_rows:
        tile_r = Bp
        needs_mask = False
    else:
        d = _largest_mult8_divisor_le(Bp, target_rows)
        if d >= max(512, target_rows // 2):
            tile_r = d                      # exact split, no masking ever needed
            needs_mask = False
        else:
            tile_r = target_rows
            needs_mask = (Bp % tile_r) != 0
    n_b_total = -(-Bp // tile_r)
    # Leading parallel axis of size 2 (both v7x TensorCores) when the tile count splits.
    n_par = 2 if (n_b_total % 2 == 0 and n_b_total >= 2) else 1
    n_b_per = n_b_total // n_par
    acc_rows = 8 if tile_r % 8 == 0 else 1

    # --- VMEM limit: 2 inputs x 2 buffers (native) + f32 upcasts/intermediates
    tile_native = tile_r * tile_l * itemsize
    tile_f32 = tile_r * tile_l * 4
    out_bytes = 3 * n_par * acc_rows * tile_l * 4
    est = 2 * 2 * tile_native + 5 * tile_f32 + 2 * out_bytes
    vmem_limit = int(min(gen_cap, max(32 * 1024 * 1024, est + 16 * 1024 * 1024)))

    kern = functools.partial(
        _wbce_kernel, tile_r=tile_r, rows_valid=Bp, n_b_per=n_b_per,
        n_b_total=n_b_total, acc_rows=acc_rows, needs_mask=needs_mask)

    part = jax.ShapeDtypeStruct((n_par, acc_rows, L), jnp.float32)
    in_map = lambda pi, ci, bi: (pi * n_b_per + bi, ci)
    out_map = lambda pi, ci, bi: (pi, 0, ci)

    cost = pl.CostEstimate(
        flops=12 * B * C,
        transcendentals=2 * B * C,
        bytes_accessed=2 * B * C * itemsize + 3 * n_par * acc_rows * L * 4)

    a_p, p_p, s_p = pl.pallas_call(
        kern,
        out_shape=(part, part, part),
        grid_spec=pltpu.PrefetchScalarGridSpec(
            num_scalar_prefetch=0,
            grid=(n_par, n_l, n_b_per),
            in_specs=[pl.BlockSpec((tile_r, tile_l), in_map),
                      pl.BlockSpec((tile_r, tile_l), in_map)],
            out_specs=[pl.BlockSpec((None, acc_rows, tile_l), out_map)] * 3,
        ),
        compiler_params=pltpu.CompilerParams(
            dimension_semantics=("parallel", "parallel", "arbitrary"),
            vmem_limit_bytes=vmem_limit),
        cost_estimate=cost,
    )(xp, tp)

    # --- tiny finalize in plain JAX: fold parallel halves, sublanes, packed lanes
    A = jnp.sum(a_p, axis=(0, 1)).reshape(g, C).sum(axis=0)
    P = jnp.sum(p_p, axis=(0, 1)).reshape(g, C).sum(axis=0)
    S = jnp.sum(s_p, axis=(0, 1)).reshape(g, C).sum(axis=0)
    pos_w = jnp.where(S == 0.0, 0.0, (B - S) / jnp.where(S == 0.0, 1.0, S))
    cw = class_weights.astype(jnp.float32)
    cw_scaled = cw / (jnp.sum(cw) * B)   # fold 1/B (full batch) into normalized weights
    return jnp.sum(cw_scaled * (A + (pos_w - 1.0) * P))


def _reference(output, target, class_weights):
    """Pure-JAX mirror of the PyTorch forward (f32 math)."""
    x = output.astype(jnp.float32)
    t = jnp.abs(target.astype(jnp.float32))
    b = t.shape[0]
    cw = class_weights.astype(jnp.float32)
    cw = cw / jnp.sum(cw)
    s = jnp.sum(t, axis=0)
    pw = jnp.where(s == 0.0, 0.0, (b - s) / jnp.where(s == 0.0, 1.0, s))
    sp_neg_x = jnp.maximum(-x, 0.0) + jnp.log1p(jnp.exp(-jnp.abs(x)))
    loss = (1.0 - t) * x + (1.0 + (pw - 1.0) * t) * sp_neg_x
    return jnp.sum(jnp.mean(loss, axis=0) * cw)


if __name__ == "__main__":
    key = jax.random.PRNGKey(0)
    k1, k2, k3, k4, k5, k6, k7 = jax.random.split(key, 7)

    # --- Test 1: typical small module shapes (B=8, C=4), f32 + bf16 ---------
    B, C = 8, 4
    output = jax.random.normal(k1, (B, C), dtype=jnp.float32)
    labels = jax.random.bernoulli(k2, 0.5, (B, C)).astype(jnp.float32)
    signs = jnp.where(jax.random.bernoulli(k3, 0.5, (B, C)), 1.0, -1.0)
    target = (labels * signs).at[:, 2].set(0.0)   # all-zero column -> pos_weight 0 branch
    cw = jnp.array([1.0, 2.0, 3.0, 4.0], dtype=jnp.float32)

    res = weighted_bce_loss(output, target, cw)
    jax.block_until_ready(res)
    ref = _reference(output, target, cw)
    assert jnp.allclose(res, ref, rtol=1e-4, atol=1e-5), (res, ref)

    out_bf16, tgt_bf16 = output.astype(jnp.bfloat16), target.astype(jnp.bfloat16)
    res_bf16 = weighted_bce_loss(out_bf16, tgt_bf16, cw)
    jax.block_until_ready(res_bf16)
    ref_bf16 = _reference(out_bf16, tgt_bf16, cw)
    assert jnp.allclose(res_bf16, ref_bf16, rtol=1e-4, atol=1e-5), (res_bf16, ref_bf16)

    # --- Test 2: bigger batch, default tile budget ---------------------------
    B2, C2 = 2600, 256
    out2 = jax.random.normal(k4, (B2, C2), dtype=jnp.float32)
    tgt2 = jax.random.bernoulli(k5, 0.3, (B2, C2)).astype(jnp.float32)
    tgt2 = tgt2.at[:, 7].set(0.0)
    cw2 = jnp.arange(1, C2 + 1, dtype=jnp.float32)
    res2 = weighted_bce_loss(out2, tgt2, cw2)
    jax.block_until_ready(res2)
    ref2 = _reference(out2, tgt2, cw2)
    assert jnp.allclose(res2, ref2, rtol=1e-4, atol=1e-5), (res2, ref2)

    # --- Test 3: tiny tile budget -> multi-tile batch grid, exact tiles, n_par=2
    B3, C3 = 2560, 256
    out3 = jax.random.normal(k6, (B3, C3), dtype=jnp.float32)
    tgt3 = jax.random.bernoulli(k7, 0.3, (B3, C3)).astype(jnp.float32)
    cw3 = jnp.arange(1, C3 + 1, dtype=jnp.float32)
    res3 = weighted_bce_loss(out3, tgt3, cw3, per_buffer_bytes=64 * 1024)
    jax.block_until_ready(res3)
    ref3 = _reference(out3, tgt3, cw3)
    assert jnp.allclose(res3, ref3, rtol=1e-4, atol=1e-5), (res3, ref3)

    # --- Test 4: tiny budget with ragged batch -> pl.when-gated masked last tile
    res4 = weighted_bce_loss(out2, tgt2, cw2, per_buffer_bytes=64 * 1024)
    jax.block_until_ready(res4)
    assert jnp.allclose(res4, ref2, rtol=1e-4, atol=1e-5), (res4, ref2)

    # --- Test 5: wide class dim -> lane-tiled (n_l > 1) path -----------------
    B5, C5 = 96, 4096
    out5 = jax.random.normal(k1, (B5, C5), dtype=jnp.float32)
    tgt5 = jax.random.bernoulli(k2, 0.2, (B5, C5)).astype(jnp.float32)
    cw5 = jnp.ones((C5,), dtype=jnp.float32)
    res5 = weighted_bce_loss(out5, tgt5, cw5, per_buffer_bytes=64 * 1024)
    jax.block_until_ready(res5)
    ref5 = _reference(out5, tgt5, cw5)
    assert jnp.allclose(res5, ref5, rtol=1e-4, atol=1e-5), (res5, ref5)

    print("KERNEL_OK")
</pallas_src>

<mosaic_0001>
module attributes {stable_mosaic.version = 11 : i64} {
  func.func @_wbce_kernel(%arg0: i32, %arg1: i32, %arg2: i32, %arg3: memref<1x32xf32, #tpu.memory_space<vmem>>, %arg4: memref<1x32xf32, #tpu.memory_space<vmem>>, %arg5: memref<1x1x32xf32, #tpu.memory_space<vmem>>, %arg6: memref<1x1x32xf32, #tpu.memory_space<vmem>>, %arg7: memref<1x1x32xf32, #tpu.memory_space<vmem>>) attributes {dimension_semantics = [#tpu.dimension_semantics<parallel>, #tpu.dimension_semantics<parallel>, #tpu.dimension_semantics<arbitrary>], iteration_bounds = array<i64: 1, 1, 1>, scalar_prefetch = 0 : i64, scratch_operands = 0 : i64, tpu.core_type = #tpu.core_type<tc>, window_params = [{transform_indices = @transform_0, window_bounds = array<i64: 1, 32>}, {transform_indices = @transform_1, window_bounds = array<i64: 1, 32>}, {transform_indices = @transform_2, window_bounds = array<i64: 1, 1, 32>}, {transform_indices = @transform_3, window_bounds = array<i64: 1, 1, 32>}, {transform_indices = @transform_4, window_bounds = array<i64: 1, 1, 32>}]} {
    %c0_i32 = arith.constant 0 : i32
    %0 = arith.cmpi eq, %arg2, %c0_i32 : i32
    %1 = arith.extui %0 : i1 to i32
    %c0_i32_0 = arith.constant 0 : i32
    %2 = arith.cmpi ne, %1, %c0_i32_0 : i32
    scf.if %2 {
      %cst_28 = arith.constant 0.000000e+00 : f32
      %45 = vector.broadcast %cst_28 : f32 to vector<1x32xf32>
      %c0_29 = arith.constant 0 : index
      %c0_30 = arith.constant 0 : index
      %c0_31 = arith.constant 0 : index
      %46 = vector.load %arg5[%c0_29, %c0_30, %c0_31] : memref<1x1x32xf32, #tpu.memory_space<vmem>>, vector<1x1x32xf32>
      %47 = vector.shape_cast %46 : vector<1x1x32xf32> to vector<1x32xf32>
      %48 = vector.shape_cast %45 : vector<1x32xf32> to vector<1x1x32xf32>
      tpu.vector_store %arg5[%c0_29, %c0_30, %c0_31], %48 {strides = array<i32>} : memref<1x1x32xf32, #tpu.memory_space<vmem>>, vector<1x1x32xf32>,
      %cst_32 = arith.constant 0.000000e+00 : f32
      %49 = vector.broadcast %cst_32 : f32 to vector<1x32xf32>
      %c0_33 = arith.constant 0 : index
      %c0_34 = arith.constant 0 : index
      %c0_35 = arith.constant 0 : index
      %50 = vector.load %arg6[%c0_33, %c0_34, %c0_35] : memref<1x1x32xf32, #tpu.memory_space<vmem>>, vector<1x1x32xf32>
      %51 = vector.shape_cast %50 : vector<1x1x32xf32> to vector<1x32xf32>
      %52 = vector.shape_cast %49 : vector<1x32xf32> to vector<1x1x32xf32>
      tpu.vector_store %arg6[%c0_33, %c0_34, %c0_35], %52 {strides = array<i32>} : memref<1x1x32xf32, #tpu.memory_space<vmem>>, vector<1x1x32xf32>,
      %cst_36 = arith.constant 0.000000e+00 : f32
      %53 = vector.broadcast %cst_36 : f32 to vector<1x32xf32>
      %c0_37 = arith.constant 0 : index
      %c0_38 = arith.constant 0 : index
      %c0_39 = arith.constant 0 : index
      %54 = vector.load %arg7[%c0_37, %c0_38, %c0_39] : memref<1x1x32xf32, #tpu.memory_space<vmem>>, vector<1x1x32xf32>
      %55 = vector.shape_cast %54 : vector<1x1x32xf32> to vector<1x32xf32>
      %56 = vector.shape_cast %53 : vector<1x32xf32> to vector<1x1x32xf32>
      tpu.vector_store %arg7[%c0_37, %c0_38, %c0_39], %56 {strides = array<i32>} : memref<1x1x32xf32, #tpu.memory_space<vmem>>, vector<1x1x32xf32>,
    } else {
    }
    %c0 = arith.constant 0 : index
    %c0_1 = arith.constant 0 : index
    %3 = vector.load %arg3[%c0, %c0_1] : memref<1x32xf32, #tpu.memory_space<vmem>>, vector<1x32xf32>
    %c0_2 = arith.constant 0 : index
    %c0_3 = arith.constant 0 : index
    %4 = vector.load %arg4[%c0_2, %c0_3] : memref<1x32xf32, #tpu.memory_space<vmem>>, vector<1x32xf32>
    %5 = math.absf %4 : vector<1x32xf32>
    %cst = arith.constant 0.000000e+00 : f32
    %6 = vector.broadcast %cst : f32 to vector<1x32xf32>
    %7 = arith.subf %6, %3 : vector<1x32xf32>
    %cst_4 = arith.constant 0.000000e+00 : f32
    %8 = vector.broadcast %cst_4 : f32 to vector<1x32xf32>
    %9 = arith.maximumf %7, %8 : vector<1x32xf32>
    %10 = math.absf %3 : vector<1x32xf32>
    %cst_5 = arith.constant 0.000000e+00 : f32
    %11 = vector.broadcast %cst_5 : f32 to vector<1x32xf32>
    %12 = arith.subf %11, %10 : vector<1x32xf32>
    %13 = math.exp %12 : vector<1x32xf32>
    %14 = math.log1p %13 : vector<1x32xf32>
    %15 = arith.addf %9, %14 : vector<1x32xf32>
    %cst_6 = arith.constant 1.000000e+00 : f32
    %16 = vector.broadcast %cst_6 : f32 to vector<1x32xf32>
    %17 = arith.subf %16, %5 : vector<1x32xf32>
    %18 = arith.mulf %17, %3 : vector<1x32xf32>
    %19 = arith.addf %18, %15 : vector<1x32xf32>
    %20 = arith.mulf %5, %15 : vector<1x32xf32>
    %c0_7 = arith.constant 0 : index
    %c0_8 = arith.constant 0 : index
    %c0_9 = arith.constant 0 : index
    %21 = vector.load %arg5[%c0_7, %c0_8, %c0_9] : memref<1x1x32xf32, #tpu.memory_space<vmem>>, vector<1x1x32xf32>
    %22 = vector.shape_cast %21 : vector<1x1x32xf32> to vector<1x32xf32>
    %cst_10 = arith.constant dense<0.000000e+00> : vector<32xf32>
    %23 = vector.multi_reduction <add>, %19, %cst_10 [0] : vector<1x32xf32> to vector<32xf32>
    %24 = vector.shape_cast %23 : vector<32xf32> to vector<1x32xf32>
    %25 = arith.addf %22, %24 : vector<1x32xf32>
    %c0_11 = arith.constant 0 : index
    %c0_12 = arith.constant 0 : index
    %c0_13 = arith.constant 0 : index
    %26 = vector.load %arg5[%c0_11, %c0_12, %c0_13] : memref<1x1x32xf32, #tpu.memory_space<vmem>>, vector<1x1x32xf32>
    %27 = vector.shape_cast %26 : vector<1x1x32xf32> to vector<1x32xf32>
    %28 = vector.shape_cast %25 : vector<1x32xf32> to vector<1x1x32xf32>
    tpu.vector_store %arg5[%c0_11, %c0_12, %c0_13], %28 {strides = array<i32>} : memref<1x1x32xf32, #tpu.memory_space<vmem>>, vector<1x1x32xf32>,
    %c0_14 = arith.constant 0 : index
    %c0_15 = arith.constant 0 : index
    %c0_16 = arith.constant 0 : index
    %29 = vector.load %arg6[%c0_14, %c0_15, %c0_16] : memref<1x1x32xf32, #tpu.memory_space<vmem>>, vector<1x1x32xf32>
    %30 = vector.shape_cast %29 : vector<1x1x32xf32> to vector<1x32xf32>
    %cst_17 = arith.constant dense<0.000000e+00> : vector<32xf32>
    %31 = vector.multi_reduction <add>, %20, %cst_17 [0] : vector<1x32xf32> to vector<32xf32>
    %32 = vector.shape_cast %31 : vector<32xf32> to vector<1x32xf32>
    %33 = arith.addf %30, %32 : vector<1x32xf32>
    %c0_18 = arith.constant 0 : index
    %c0_19 = arith.constant 0 : index
    %c0_20 = arith.constant 0 : index
    %34 = vector.load %arg6[%c0_18, %c0_19, %c0_20] : memref<1x1x32xf32, #tpu.memory_space<vmem>>, vector<1x1x32xf32>
    %35 = vector.shape_cast %34 : vector<1x1x32xf32> to vector<1x32xf32>
    %36 = vector.shape_cast %33 : vector<1x32xf32> to vector<1x1x32xf32>
    tpu.vector_store %arg6[%c0_18, %c0_19, %c0_20], %36 {strides = array<i32>} : memref<1x1x32xf32, #tpu.memory_space<vmem>>, vector<1x1x32xf32>,
    %c0_21 = arith.constant 0 : index
    %c0_22 = arith.constant 0 : index
    %c0_23 = arith.constant 0 : index
    %37 = vector.load %arg7[%c0_21, %c0_22, %c0_23] : memref<1x1x32xf32, #tpu.memory_space<vmem>>, vector<1x1x32xf32>
    %38 = vector.shape_cast %37 : vector<1x1x32xf32> to vector<1x32xf32>
    %cst_24 = arith.constant dense<0.000000e+00> : vector<32xf32>
    %39 = vector.multi_reduction <add>, %5, %cst_24 [0] : vector<1x32xf32> to vector<32xf32>
    %40 = vector.shape_cast %39 : vector<32xf32> to vector<1x32xf32>
    %41 = arith.addf %38, %40 : vector<1x32xf32>
    %c0_25 = arith.constant 0 : index
    %c0_26 = arith.constant 0 : index
    %c0_27 = arith.constant 0 : index
    %42 = vector.load %arg7[%c0_25, %c0_26, %c0_27] : memref<1x1x32xf32, #tpu.memory_space<vmem>>, vector<1x1x32xf32>
    %43 = vector.shape_cast %42 : vector<1x1x32xf32> to vector<1x32xf32>
    %44 = vector.shape_cast %41 : vector<1x32xf32> to vector<1x1x32xf32>
    tpu.vector_store %arg7[%c0_25, %c0_26, %c0_27], %44 {strides = array<i32>} : memref<1x1x32xf32, #tpu.memory_space<vmem>>, vector<1x1x32xf32>,
    return
  }
  func.func @transform_0(%arg0: i32, %arg1: i32, %arg2: i32) -> (i32, i32) {
    %c1_i32 = arith.constant 1 : i32
    %0 = arith.muli %arg0, %c1_i32 : i32
    %1 = arith.addi %0, %arg2 : i32
    %c0_i32 = arith.constant 0 : i32
    return %1, %arg1 : i32, i32
  }
  func.func @transform_1(%arg0: i32, %arg1: i32, %arg2: i32) -> (i32, i32) {
    %c1_i32 = arith.constant 1 : i32
    %0 = arith.muli %arg0, %c1_i32 : i32
    %1 = arith.addi %0, %arg2 : i32
    %c0_i32 = arith.constant 0 : i32
    return %1, %arg1 : i32, i32
  }
  func.func @transform_2(%arg0: i32, %arg1: i32, %arg2: i32) -> (i32, i32, i32) {
    %c0_i32 = arith.constant 0 : i32
    %c0_i32_0 = arith.constant 0 : i32
    return %arg0, %c0_i32, %arg1 : i32, i32, i32
  }
  func.func @transform_3(%arg0: i32, %arg1: i32, %arg2: i32) -> (i32, i32, i32) {
    %c0_i32 = arith.constant 0 : i32
    %c0_i32_0 = arith.constant 0 : i32
    return %arg0, %c0_i32, %arg1 : i32, i32, i32
  }
  func.func @transform_4(%arg0: i32, %arg1: i32, %arg2: i32) -> (i32, i32, i32) {
    %c0_i32 = arith.constant 0 : i32
    %c0_i32_0 = arith.constant 0 : i32
    return %arg0, %c0_i32, %arg1 : i32, i32, i32
  }
}

</mosaic_0001>

<llo_original>
// kernel: tpu_custom_call.1
$region0: #{tpu_custom_call.1}
  #allocation0 [shape = 'u32[]', space=smem, size = 0x4, offset = 0x4, fixed_abs, tag = 'smem constant byte address 0x4 - core index']
  #allocation1 [shape = 'u32[144,128]{1,0:T(1,128)}', space=vmem, size = 0x12000, scoped, tag = 'internal scratch']
  %s0 = inlined_call_operand.hbm [shape: f32[1,32], index: 0, kind: input, shape index: {}]
  %s1 = inlined_call_operand.vmem [shape: f32[1,32], index: 1, kind: input, shape index: {}]
  %s2 = inlined_call_operand.hbm [shape: f32[1,1,32], index: 2, kind: output, shape index: {0}]
  %s3 = inlined_call_operand.hbm [shape: f32[1,1,32], index: 3, kind: output, shape index: {1}]
  %s4 = inlined_call_operand.hbm [shape: f32[1,1,32], index: 4, kind: output, shape index: {2}]
  %5 = xla_tuple %s2, %s3, %s4
  %s6 = sld [smem:[#allocation0]]
  $region42: #{tpu_custom_call.1} parent=0
    _
  %s8 = ssub.s32 1, %s6
  %s9 = scalar_select 0, %s8, %s6
  $region1: #{tpu_custom_call.1} parent=0
    #allocation2 [shape = 'u8[512]{0}', space=vmem, size = 0x400, scoped, tag = 'input window, operand 0, single buffered']
    #allocation3 [shape = 's32[1]{0}', space=sflag, size = 0x4, scoped, tag = 'scoped memory for tpu_custom_call.1']
    #allocation4 [shape = 's32[1]{0}', space=sflag, size = 0x4, scoped, tag = 'scoped memory for tpu_custom_call.1']
    #allocation5 [shape = 'u8[512]{0}', space=vmem, size = 0x400, scoped, tag = 'output window, operand 0, single buffered']
    #allocation6 [shape = 'u8[512]{0}', space=vmem, size = 0x400, scoped, tag = 'output window, operand 1, single buffered']
    #allocation7 [shape = 's32[1]{0}', space=sflag, size = 0x4, scoped, tag = 'scoped memory for tpu_custom_call.1']
    #allocation8 [shape = 'u8[512]{0}', space=vmem, size = 0x400, scoped, tag = 'output window, operand 2, single buffered']
    %10 = vsyncpa [#allocation3], 0
    %11 = vsyncpa [#allocation4], 0
    %12 = vsyncpa [#allocation7], 0
    // Predicated region
    $region2: #{tpu_custom_call.1} parent=1 // pred_check
      _
    $region3: #{tpu_custom_call.1} parent=1 // pred_check_branch
      %14 = sbr.rel (0) target = $region5
    $region4: #{tpu_custom_call.1} parent=1 // pred_region
      %s15 = sadd.s32 0, 0
      %s17 = ssub.s32 16, 16
      %18 = vsyncadd [#allocation3], %s17
      %s19 = smul.addr %s15, 16
      %s20 = scalar_lea.hbm %s0, %s19
      %s22 = sshll.u32 [#allocation2], 4
      %s23 = int_to_ptr.vmem [resolvable:$true] %s22
      %25 = dma.hbm_to_vmem [thread:$0]  %s20, 16, %s23, [#allocation3]
    $region5: #{tpu_custom_call.1} parent=1 // pred_fallthru
      _
    // Predicated region
    $region6: #{tpu_custom_call.1} parent=1 // pred_check
      _
    $region7: #{tpu_custom_call.1} parent=1 // pred_check_branch
      %27 = sbr.rel (0) target = $region9
    $region8: #{tpu_custom_call.1} parent=1 // pred_region
      %s28 = sadd.s32 0, 0
      %p29 = scmp.lt.s32.totalorder %s28, 0
      %s30 = scalar_select %p29, %s28, 0
      %s31 = scalar_lea.vmem %s1, %s30
      %s32 = sadd.s32 0, 0
    $region9: #{tpu_custom_call.1} parent=1 // pred_fallthru
      _
    // Predicated region
    $region10: #{tpu_custom_call.1} parent=1 // pred_check
      _
    $region11: #{tpu_custom_call.1} parent=1 // pred_check_branch
      %34 = sbr.rel (0) target = $region13
    $region12: #{tpu_custom_call.1} parent=1 // pred_region
      %35 = dma.done [#allocation3], 16
    $region13: #{tpu_custom_call.1} parent=1 // pred_fallthru
      _
    %s36 = sadd.s32 0, 0
    %p37 = scmp.lt.s32.totalorder %s36, 0
    %s38 = scalar_select %p37, %s36, 0
    %s39 = scalar_lea.vmem %s1, %s38
    %s40 = sadd.s32 0, 0
    %s41 = sadd.s32 0, 0
    %p42 = scmp.lt.s32.totalorder %s41, 0
    %s43 = scalar_select %p42, %s41, 0
    %s44 = scalar_lea.vmem %s1, %s43
    %s45 = sadd.s32 0, 0
    %p46 = scmp.eq.s32.totalorder 0, 0
    // Predicated region
    $region14: #{tpu_custom_call.1} parent=1 // pred_check
      %p47 = pneg %p46
    $region15: #{tpu_custom_call.1} parent=1 // pred_check_branch
      %49 = sbr.rel (%p47) target = $region17
    $region16: #{tpu_custom_call.1} parent=1 // pred_region
      %vm50 = vcmask 253952
      %51 = vst.msk [vmem:[#allocation5] sm:$0x1] %vm50, 0.0
      %52 = vst.msk [vmem:[#allocation6] sm:$0x1] %vm50, 0.0
      %53 = vst.msk [vmem:[#allocation8] sm:$0x1] %vm50, 0.0
    $region17: #{tpu_custom_call.1} parent=1 // pred_fallthru
      _
    %v54 = vld [vmem:[#allocation2] sm:$0x1]
    %v55 = vld [vmem:[%s44] sm:$0x1]
    %v56 = vand.u32 2147483647, %v55
    %v57 = vsub.f32 0.0, %v54
    %v58 = vmax.f32 %v57, 0.0
    %v59 = vand.u32 2147483647, %v54
    %v60 = vsub.f32 0.0, %v59
    %v61 = vmul.f32 %v60, 1.442695
    %v62 = vpow.pop %v61
    %v63 = vadd.f32 %v62, 1.0
    %v64 = vlog2.pop %v63
    %v65 = vmul.f32 %v64, 0.6931472
    %v66 = vmul.f32 -0.5, %v62
    %v67 = vadd.f32 %v66, 1.0
    %v68 = vmul.f32 %v67, %v62
    %v69 = vand.u32 2147483647, %v62
    %vm70 = vcmp.lt.f32.partialorder %v69, 0.0004427343
    %v71 = vsel %vm70, %v68, %v65
    %v72 = vadd.f32 %v58, %v71
    %v73 = vsub.f32 1.0, %v56
    %v74 = vmul.f32 %v73, %v54
    %v75 = vadd.f32 %v74, %v72
    %v76 = vmul.f32 %v56, %v72
    %v77 = vld [vmem:[#allocation5] sm:$0x1]
    %v78 = vadd.f32 %v75, 0.0
    %v79 = vadd.f32 %v77, %v78
    %vm80 = vcmask 253952
    %81 = vst.msk [vmem:[#allocation5] sm:$0x1] %vm80, %v79
    %v82 = vld [vmem:[#allocation6] sm:$0x1]
    %v83 = vadd.f32 %v76, 0.0
    %v84 = vadd.f32 %v82, %v83
    %85 = vst.msk [vmem:[#allocation6] sm:$0x1] %vm80, %v84
    %v86 = vld [vmem:[#allocation8] sm:$0x1]
    %v87 = vadd.f32 %v56, 0.0
    %v88 = vadd.f32 %v86, %v87
    %89 = vst.msk [vmem:[#allocation8] sm:$0x1] %vm80, %v88
    // Predicated region
    $region18: #{tpu_custom_call.1} parent=1 // pred_check
      _
    $region19: #{tpu_custom_call.1} parent=1 // pred_check_branch
      %91 = sbr.rel (0) target = $region21
    $region20: #{tpu_custom_call.1} parent=1 // pred_region
      %s93 = ssub.s32 16, 16
      %94 = vsyncadd [#allocation4], %s93
      %s96 = sshll.u32 [#allocation5], 4
      %s97 = int_to_ptr.vmem [resolvable:$true] %s96
      %99 = dma.vmem_to_hbm [thread:$0]  %s97, 16, %s2, [#allocation4]
    $region21: #{tpu_custom_call.1} parent=1 // pred_fallthru
      _
    // Predicated region
    $region22: #{tpu_custom_call.1} parent=1 // pred_check
      _
    $region23: #{tpu_custom_call.1} parent=1 // pred_check_branch
      %101 = sbr.rel (0) target = $region25
    $region24: #{tpu_custom_call.1} parent=1 // pred_region
      %s103 = ssub.s32 16, 16
      %104 = vsyncadd [#allocation7], %s103
      %s106 = sshll.u32 [#allocation6], 4
      %s107 = int_to_ptr.vmem [resolvable:$true] %s106
      %109 = dma.vmem_to_hbm [thread:$0]  %s107, 16, %s3, [#allocation7]
    $region25: #{tpu_custom_call.1} parent=1 // pred_fallthru
      _
    // Predicated region
    $region26: #{tpu_custom_call.1} parent=1 // pred_check
      _
    $region27: #{tpu_custom_call.1} parent=1 // pred_check_branch
      %111 = sbr.rel (0) target = $region29
    $region28: #{tpu_custom_call.1} parent=1 // pred_region
      %s113 = ssub.s32 16, 16
      %114 = vsyncadd [#allocation7], %s113
      %s116 = sshll.u32 [#allocation8], 4
      %s117 = int_to_ptr.vmem [resolvable:$true] %s116
      %119 = dma.vmem_to_hbm [thread:$0]  %s117, 16, %s4, [#allocation7]
    $region29: #{tpu_custom_call.1} parent=1 // pred_fallthru
      _
    // Predicated region
    $region30: #{tpu_custom_call.1} parent=1 // pred_check
      _
    $region31: #{tpu_custom_call.1} parent=1 // pred_check_branch
      %121 = sbr.rel (0) target = $region33
    $region32: #{tpu_custom_call.1} parent=1 // pred_region
      %122 = dma.done [#allocation4], 16
    $region33: #{tpu_custom_call.1} parent=1 // pred_fallthru
      _
    // Predicated region
    $region34: #{tpu_custom_call.1} parent=1 // pred_check
      _
    $region35: #{tpu_custom_call.1} parent=1 // pred_check_branch
      %124 = sbr.rel (0) target = $region37
    $region36: #{tpu_custom_call.1} parent=1 // pred_region
      %125 = dma.done [#allocation7], 16
    $region37: #{tpu_custom_call.1} parent=1 // pred_fallthru
      _
    // Predicated region
    $region38: #{tpu_custom_call.1} parent=1 // pred_check
      _
    $region39: #{tpu_custom_call.1} parent=1 // pred_check_branch
      %127 = sbr.rel (0) target = $region41
    $region40: #{tpu_custom_call.1} parent=1 // pred_region
      %128 = dma.done [#allocation7], 16
    $region41: #{tpu_custom_call.1} parent=1 // pred_fallthru
      _
    %129 = vsyncpa [#allocation3], 1
    %130 = vsyncpa [#allocation4], 1
    %131 = vsyncpa [#allocation7], 1

</llo_original>
